<compile_context>
chip_gen: v6e
topology: v6e:2x2x1
jax: 0.10.0
libtpu: 0.0.40
codegen_flags: <defaults>
</compile_context>

<pallas_src>
import functools

import jax
import jax.numpy as jnp
from jax.experimental import pallas as pl
from jax.experimental.pallas import tpu as pltpu


def _round_up(x, m):
    return (x + m - 1) // m * m


# ----------------------------------------------------------------------------
# Kernel 1: per-segment masked reductions (the hot loop of compute_features)
# ----------------------------------------------------------------------------
def _seg_reduce_kernel(seg_ref, feat_ref, out_ref, acc_ref, *, n_chunks):
    # seg_ref:  (1, 1, chunk)     int32 labels, HW in lanes (pad label = s_pad)
    # feat_ref: (1, nfeat, chunk) f32 per-pixel features, lane-dense, zero-padded
    # out_ref:  (1, nfeat, s_pad) f32 per-segment sums (written on last chunk)
    # acc_ref:  (nfeat, s_pad)    f32 VMEM scratch accumulator
    k = pl.program_id(1)
    s_pad = out_ref.shape[2]
    chunk = seg_ref.shape[2]

    seg = seg_ref[0]                                     # (1, chunk) int32
    feat = feat_ref[0]                                   # (nfeat, chunk) f32

    # Lane-dense compare: chunk sits in lanes, s_pad (multiple of 8) in sublanes.
    labels = jax.lax.broadcasted_iota(jnp.int32, (s_pad, chunk), 0)
    onehot = (seg == labels).astype(jnp.float32)         # exact {0,1} masks

    # MXU: (nfeat, chunk) x (s_pad, chunk)^T -> (nfeat, s_pad); S lands in lanes.
    partial = jax.lax.dot_general(
        feat, onehot, (((1,), (1,)), ((), ())),
        preferred_element_type=jnp.float32)

    @pl.when(k == 0)
    def _():
        acc_ref[...] = partial                           # store, no zero+RMW

    @pl.when(k > 0)
    def _():
        acc_ref[...] += partial

    @pl.when(k == n_chunks - 1)
    def _():
        out_ref[0] = acc_ref[...]                        # single writeback


def segment_sums(segmaps_flat, feats, num_segments):
    """segmaps_flat: (B, 1, HW) int32; feats: (B, nfeat, HW) f32 (lane-dense).

    Returns (B, nfeat, s_pad) f32 per-segment sums, s_pad = round_up(S, 8).
    """
    B, _, HW = segmaps_flat.shape
    nfeat = feats.shape[1]
    s_pad = _round_up(num_segments, 8)                   # MXU M/sublane needs 8 only

    # Chunk the HW (lane) reduction axis. Lane-dense feats keep the per-step
    # working set tiny (~(nfeat+1)*chunk*4B + (s_pad*chunk*4B) transient), so
    # chunk=4096 is safe on every generation (incl. v7x's 64 MiB VMEM).
    chunk = 4096 if HW > 4096 else _round_up(HW, 128)
    hw_pad = _round_up(HW, chunk)
    n_chunks = hw_pad // chunk
    if hw_pad != HW:
        # Pad with an out-of-range label (never matches any segment row) and
        # zero features: no tail mask in the kernel, no stale-VMEM NaN hazard.
        segmaps_flat = jnp.pad(segmaps_flat, ((0, 0), (0, 0), (0, hw_pad - HW)),
                               constant_values=s_pad)
        feats = jnp.pad(feats, ((0, 0), (0, 0), (0, hw_pad - HW)))

    kernel = functools.partial(_seg_reduce_kernel, n_chunks=n_chunks)

    # TODO(synk): for v7x with B == 1 the only parallel axis has one step; a
    # 2-way split of the chunk axis into independent partial sums would keep
    # both TensorCores busy.
    return pl.pallas_call(
        kernel,
        out_shape=jax.ShapeDtypeStruct((B, nfeat, s_pad), jnp.float32),
        grid=(B, n_chunks),
        in_specs=[
            pl.BlockSpec((1, 1, chunk), lambda b, k: (b, 0, k)),
            pl.BlockSpec((1, nfeat, chunk), lambda b, k: (b, 0, k)),
        ],
        out_specs=pl.BlockSpec((1, nfeat, s_pad), lambda b, k: (b, 0, 0)),
        scratch_shapes=[pltpu.VMEM((nfeat, s_pad), jnp.float32)],
        compiler_params=pltpu.CompilerParams(
            dimension_semantics=("parallel", "arbitrary"),
            vmem_limit_bytes=32 * 1024 * 1024),
    )(segmaps_flat, feats)


# ----------------------------------------------------------------------------
# Kernel 2: the conv stem (all 1x1 convs -> per-row MLP), BN folded in.
# ----------------------------------------------------------------------------
def _mlp_kernel(x_ref, w1, b1, w2, b2, w3, b3, w4, b4, w5, b5, o_ref):
    # bf16 inputs on the MXU (v6e/v7x native), f32 accumulate, f32 bias/ReLU.
    def layer(h, w, b, relu):
        y = jnp.dot(h.astype(jnp.bfloat16), w[...],
                    preferred_element_type=jnp.float32) + b[...]
        return jnp.maximum(y, 0.0) if relu else y

    h = x_ref[...]
    h = layer(h, w1, b1, True)
    h = layer(h, w2, b2, True)
    h = layer(h, w3, b3, True)
    h = layer(h, w4, b4, True)
    o_ref[...] = layer(h, w5, b5, False)   # last block: Conv + BN, no activation


def conv_stack(x_rows, ws_p, bs_p, cin, cout):
    """x_rows: (M, cin) f32 -> (M, cout) f32, 5 fused (1x1 conv + BN [+ ReLU]).

    ws_p/bs_p are pre-padded (128-aligned lanes), BN-folded params from init.
    """
    M = x_rows.shape[0]
    cin_p = ws_p[0].shape[0]
    cout_p = ws_p[-1].shape[1]

    # Row tiling: >=2 row blocks when M is small (keeps both v7x TCs busy,
    # negligible cost on single-TC v5e/v6e); 512-row tiles otherwise
    # (amortizes the ~0.35us/step pipeline overhead, fills MXU sublanes).
    if M <= 1024:
        tm = max(8, _round_up((M + 1) // 2, 8))
    else:
        tm = 512
    m_pad = _round_up(M, tm)
    x_p = jnp.pad(x_rows, ((0, m_pad - M), (0, cin_p - cin)))

    # Weights/biases are grid-invariant (index_map constant). Keeping them on
    # the default buffering is fine at these sizes; at out_dim ~1K on v7x,
    # pipeline_mode=pl.Buffered(1) would halve their resident VMEM.
    in_specs = [pl.BlockSpec((tm, cin_p), lambda i: (i, 0))]
    args = [x_p]
    for w, b in zip(ws_p, bs_p):
        in_specs.append(pl.BlockSpec(w.shape, lambda i: (0, 0)))
        in_specs.append(pl.BlockSpec(b.shape, lambda i: (0, 0)))
        args.extend([w, b])

    out = pl.pallas_call(
        _mlp_kernel,
        out_shape=jax.ShapeDtypeStruct((m_pad, cout_p), jnp.float32),
        grid=(m_pad // tm,),
        in_specs=in_specs,
        out_specs=pl.BlockSpec((tm, cout_p), lambda i: (i, 0)),
        compiler_params=pltpu.CompilerParams(
            dimension_semantics=("parallel",),
            vmem_limit_bytes=32 * 1024 * 1024),
    )(*args)
    return out[:M, :cout]


# ----------------------------------------------------------------------------
# Glue: segmentation, feature assembly, parameter init, full forward
# ----------------------------------------------------------------------------
def grid_segmentation(B, H, W, num_rows):
    # TODO(synk): fast_slic's iterative k-means superpixel refinement (CPU/numpy)
    # has no clean Pallas equivalent; use SLIC's regular grid initialization
    # (num_rows x num_rows tiling) as the deterministic segmentation map.
    ys = (jnp.arange(H) * num_rows) // H
    xs = (jnp.arange(W) * num_rows) // W
    seg = (ys[:, None] * num_rows + xs[None, :]).astype(jnp.int32)
    return jnp.broadcast_to(seg, (B, H, W))


def compute_features(x, segmaps, num_rows):
    # x: (B, C, H, W) f32, segmaps: (B, H, W) int32
    B, C, H, W = x.shape
    S = num_rows * num_rows
    HW = H * W
    imgs = jnp.transpose(x, (0, 2, 3, 1))                    # NHWC (for gather)
    c0 = x[:, 0, :, :].reshape(B, HW)                        # (B, HW)

    y_grid, x_grid = jnp.meshgrid(jnp.arange(H, dtype=jnp.float32),
                                  jnp.arange(W, dtype=jnp.float32), indexing="ij")
    ones = jnp.ones((B, HW), jnp.float32)
    xg = jnp.broadcast_to(x_grid.reshape(1, HW), (B, HW))
    yg = jnp.broadcast_to(y_grid.reshape(1, HW), (B, HW))
    zeros = jnp.zeros((B, HW), jnp.float32)
    # 5 real features (+3 zero rows -> 8 sublanes); HW in lanes (lane-dense).
    feats = jnp.stack([ones, xg, yg, c0, c0 * c0, zeros, zeros, zeros], axis=1)
    seg_flat = segmaps.reshape(B, 1, HW).astype(jnp.int32)

    # NOTE: with the fixed grid segmentation this could be a plain window sum;
    # the Pallas onehot reduction is kept for generality (data-dependent segmaps).
    sums = segment_sums(seg_flat, feats, S)[:, :, :S]        # (B, 8, S) via Pallas
    count = sums[:, 0, :]
    sum_x = sums[:, 1, :]
    sum_y = sums[:, 2, :]
    sum_c = sums[:, 3, :]
    sum_c2 = sums[:, 4, :]

    nan_idx = count == 0.0                                   # torch.isnan path
    safe_count = jnp.where(nan_idx, 1.0, count)
    x_cent = jnp.where(nan_idx, 0.0, sum_x / safe_count)     # nan_to_num
    y_cent = jnp.where(nan_idx, 0.0, sum_y / safe_count)
    centroids = jnp.stack([x_cent, y_cent], axis=-1)         # (B, S, 2)

    n = float(HW)
    mean_all = sum_c / n                                     # mean over ALL pixels (as in torch)
    var_all = jnp.maximum(sum_c2 - n * mean_all * mean_all, 0.0) / (n - 1.0)  # unbiased std
    std_all = jnp.sqrt(var_all)
    slic_means = jnp.stack([mean_all, mean_all, mean_all], axis=-1)   # (B, S, 3)
    slic_stds = jnp.stack([std_all, std_all, std_all], axis=-1)       # (B, S, 3)

    x_r = jnp.clip(jnp.round(x_cent).astype(jnp.int32), 0, W - 1)
    y_r = jnp.clip(jnp.round(y_cent).astype(jnp.int32), 0, H - 1)
    bidx = jnp.arange(B)[:, None]
    rgb_cent = imgs[bidx, y_r, x_r, :]                       # (B, S, C)
    rgb_cent = jnp.where(nan_idx[..., None], 0.0, rgb_cent)

    out = jnp.concatenate([centroids, slic_means, slic_stds, rgb_cent], axis=-1)
    feat_dim = out.shape[-1]                                 # 2 + 3 + 3 + C (= 11 for C=3)
    out = jnp.transpose(out, (0, 2, 1)).reshape(B, feat_dim, num_rows, num_rows)
    return out


def init_conv_params(key, in_dim, out_dim, eps=1e-5):
    """BN-folded, 128-lane-padded, bf16 conv weights + f32 biases.

    Padding and BN folding are done once here (hoisted out of the forward path
    so no per-call jnp.pad / scale ops run before the Pallas MLP kernel).
    """
    dims = [in_dim, out_dim // 8, out_dim // 4, out_dim // 2, out_dim, out_dim]
    dims_p = [_round_up(d, 128) for d in dims]
    ws, bs = [], []
    for i in range(5):
        cin, cout = dims[i], dims[i + 1]
        key, k1, k2, k3, k4, k5, k6 = jax.random.split(key, 7)
        w = jax.random.normal(k1, (cin, cout), jnp.float32) / jnp.sqrt(float(cin))
        b_conv = 0.1 * jax.random.normal(k2, (cout,), jnp.float32)
        gamma = 1.0 + 0.1 * jax.random.normal(k3, (cout,), jnp.float32)
        beta = 0.1 * jax.random.normal(k4, (cout,), jnp.float32)
        rmean = 0.1 * jax.random.normal(k5, (cout,), jnp.float32)
        rvar = jnp.abs(1.0 + 0.1 * jax.random.normal(k6, (cout,), jnp.float32))
        scale = gamma / jnp.sqrt(rvar + eps)
        w_fold = w * scale[None, :]                          # fold BN scale into conv weight
        b_fold = (b_conv - rmean) * scale + beta
        w_p = jnp.pad(w_fold, ((0, dims_p[i] - cin), (0, dims_p[i + 1] - cout)))
        b_p = jnp.pad(b_fold.reshape(1, -1), ((0, 0), (0, dims_p[i + 1] - cout)))
        ws.append(w_p.astype(jnp.bfloat16))                  # bf16 MXU inputs
        bs.append(b_p)                                       # bias stays f32
    return ws, bs


def stem_slic_forward(x, org_x, ws, bs, num_rows, out_dim):
    del org_x  # only consumed by the (replaced) SLIC superpixel step
    B, C, H, W = x.shape
    S = num_rows * num_rows
    x_slic = grid_segmentation(B, H, W, num_rows)            # (B, H, W) int32
    feats = compute_features(x, x_slic, num_rows)            # (B, 11, nr, nr)
    feat_dim = feats.shape[1]
    rows = jnp.transpose(feats.reshape(B, feat_dim, S), (0, 2, 1)).reshape(B * S, feat_dim)
    out_rows = conv_stack(rows, ws, bs, feat_dim, out_dim)   # (B*S, out_dim) via Pallas
    out = jnp.transpose(out_rows.reshape(B, S, out_dim), (0, 2, 1))
    out = out.reshape(B, out_dim, num_rows, num_rows)
    return x_slic, out


if __name__ == "__main__":
    B, C, H, W = 2, 3, 16, 16
    num_rows = 4                 # -> 16 segments
    in_dim = 2 + 3 + 3 + C       # = 11, matches the module's in_dim
    out_dim = 32

    key = jax.random.PRNGKey(0)
    kx, ko, kp = jax.random.split(key, 3)
    x = jax.random.normal(kx, (B, C, H, W), jnp.float32)
    org_x = (jax.random.uniform(ko, (B, C, H, W)) * 255.0).astype(jnp.uint8)

    ws, bs = init_conv_params(kp, in_dim, out_dim)

    x_slic, y = stem_slic_forward(x, org_x, ws, bs, num_rows, out_dim)
    jax.block_until_ready((x_slic, y))

    assert x_slic.shape == (B, H, W)
    assert y.shape == (B, out_dim, num_rows, num_rows)
    assert bool(jnp.all(jnp.isfinite(y)))
    print("KERNEL_OK")
</pallas_src>

<mosaic_0001>
module attributes {stable_mosaic.version = 11 : i64} {
  func.func @_seg_reduce_kernel(%arg0: i32, %arg1: i32, %arg2: memref<1x1x256xi32, #tpu.memory_space<vmem>>, %arg3: memref<1x8x256xf32, #tpu.memory_space<vmem>>, %arg4: memref<1x8x16xf32, #tpu.memory_space<vmem>>, %arg5: memref<8x16xf32, #tpu.memory_space<vmem>>) attributes {dimension_semantics = [#tpu.dimension_semantics<parallel>, #tpu.dimension_semantics<arbitrary>], iteration_bounds = array<i64: 2, 1>, scalar_prefetch = 0 : i64, scratch_operands = 1 : i64, tpu.core_type = #tpu.core_type<tc>, window_params = [{transform_indices = @transform_0, window_bounds = array<i64: 1, 1, 256>}, {transform_indices = @transform_1, window_bounds = array<i64: 1, 8, 256>}, {transform_indices = @transform_2, window_bounds = array<i64: 1, 8, 16>}]} {
    %c0 = arith.constant 0 : index
    %c0_0 = arith.constant 0 : index
    %c0_1 = arith.constant 0 : index
    %0 = vector.load %arg2[%c0, %c0_0, %c0_1] : memref<1x1x256xi32, #tpu.memory_space<vmem>>, vector<1x1x256xi32>
    %1 = vector.shape_cast %0 : vector<1x1x256xi32> to vector<1x256xi32>
    %c0_2 = arith.constant 0 : index
    %c0_3 = arith.constant 0 : index
    %c0_4 = arith.constant 0 : index
    %2 = vector.load %arg3[%c0_2, %c0_3, %c0_4] : memref<1x8x256xf32, #tpu.memory_space<vmem>>, vector<1x8x256xf32>
    %3 = vector.shape_cast %2 : vector<1x8x256xf32> to vector<8x256xf32>
    %4 = tpu.iota {dimensions = array<i32: 0>} : vector<16x256xi32>
    %5 = vector.broadcast %1 : vector<1x256xi32> to vector<16x256xi32>
    %6 = arith.cmpi eq, %5, %4 : vector<16x256xi32>
    %7 = arith.extui %6 : vector<16x256xi1> to vector<16x256xi32>
    %8 = arith.sitofp %7 : vector<16x256xi32> to vector<16x256xf32>
    %cst = arith.constant dense<0.000000e+00> : vector<8x16xf32>
    %9 = tpu.matmul %3, %8, %cst {dimension_numbers = #tpu.dot_dimension_numbers<[1], [1], [0], [0], [0, 0, 1, 0], [], []>} : vector<8x256xf32>, vector<16x256xf32>, vector<8x16xf32> -> vector<8x16xf32>
    %c0_i32 = arith.constant 0 : i32
    %10 = arith.cmpi eq, %arg1, %c0_i32 : i32
    %11 = arith.extui %10 : i1 to i32
    %c0_i32_5 = arith.constant 0 : i32
    %12 = arith.cmpi ne, %11, %c0_i32_5 : i32
    scf.if %12 {
      %c0_10 = arith.constant 0 : index
      %c0_11 = arith.constant 0 : index
      %19 = vector.load %arg5[%c0_10, %c0_11] : memref<8x16xf32, #tpu.memory_space<vmem>>, vector<8x16xf32>
      tpu.vector_store %arg5[%c0_10, %c0_11], %9 {strides = array<i32>} : memref<8x16xf32, #tpu.memory_space<vmem>>, vector<8x16xf32>,
    } else {
    }
    %c0_i32_6 = arith.constant 0 : i32
    %13 = arith.cmpi sgt, %arg1, %c0_i32_6 : i32
    %14 = arith.extui %13 : i1 to i32
    %c0_i32_7 = arith.constant 0 : i32
    %15 = arith.cmpi ne, %14, %c0_i32_7 : i32
    scf.if %15 {
      %c0_10 = arith.constant 0 : index
      %c0_11 = arith.constant 0 : index
      %19 = vector.load %arg5[%c0_10, %c0_11] : memref<8x16xf32, #tpu.memory_space<vmem>>, vector<8x16xf32>
      %20 = arith.addf %19, %9 : vector<8x16xf32>
      %c0_12 = arith.constant 0 : index
      %c0_13 = arith.constant 0 : index
      %21 = vector.load %arg5[%c0_12, %c0_13] : memref<8x16xf32, #tpu.memory_space<vmem>>, vector<8x16xf32>
      tpu.vector_store %arg5[%c0_12, %c0_13], %20 {strides = array<i32>} : memref<8x16xf32, #tpu.memory_space<vmem>>, vector<8x16xf32>,
    } else {
    }
    %c0_i32_8 = arith.constant 0 : i32
    %16 = arith.cmpi eq, %arg1, %c0_i32_8 : i32
    %17 = arith.extui %16 : i1 to i32
    %c0_i32_9 = arith.constant 0 : i32
    %18 = arith.cmpi ne, %17, %c0_i32_9 : i32
    scf.if %18 {
      %c0_10 = arith.constant 0 : index
      %c0_11 = arith.constant 0 : index
      %19 = vector.load %arg5[%c0_10, %c0_11] : memref<8x16xf32, #tpu.memory_space<vmem>>, vector<8x16xf32>
      %c0_12 = arith.constant 0 : index
      %c0_13 = arith.constant 0 : index
      %c0_14 = arith.constant 0 : index
      %20 = vector.load %arg4[%c0_12, %c0_13, %c0_14] : memref<1x8x16xf32, #tpu.memory_space<vmem>>, vector<1x8x16xf32>
      %21 = vector.shape_cast %20 : vector<1x8x16xf32> to vector<8x16xf32>
      %22 = vector.shape_cast %19 : vector<8x16xf32> to vector<1x8x16xf32>
      tpu.vector_store %arg4[%c0_12, %c0_13, %c0_14], %22 {strides = array<i32>} : memref<1x8x16xf32, #tpu.memory_space<vmem>>, vector<1x8x16xf32>,
    } else {
    }
    return
  }
  func.func @transform_0(%arg0: i32, %arg1: i32) -> (i32, i32, i32) {
    %c0_i32 = arith.constant 0 : i32
    %c0_i32_0 = arith.constant 0 : i32
    return %arg0, %c0_i32, %arg1 : i32, i32, i32
  }
  func.func @transform_1(%arg0: i32, %arg1: i32) -> (i32, i32, i32) {
    %c0_i32 = arith.constant 0 : i32
    %c0_i32_0 = arith.constant 0 : i32
    return %arg0, %c0_i32, %arg1 : i32, i32, i32
  }
  func.func @transform_2(%arg0: i32, %arg1: i32) -> (i32, i32, i32) {
    %c0_i32 = arith.constant 0 : i32
    %c0_i32_0 = arith.constant 0 : i32
    %c0_i32_1 = arith.constant 0 : i32
    return %arg0, %c0_i32, %c0_i32_0 : i32, i32, i32
  }
}

</mosaic_0001>

<llo_original>
// kernel: tpu_custom_call.1
$region0: #{tpu_custom_call.1}
  #allocation0 [shape = 'u32[]', space=smem, size = 0x4, offset = 0x4, fixed_abs, tag = 'smem constant byte address 0x4 - core index']
  #allocation1 [shape = 'u32[144,128]{1,0:T(1,128)}', space=vmem, size = 0x12000, scoped, tag = 'internal scratch']
  #allocation2 [shape = 'f32[8,16]{1,0:T(8,128)}', space=vmem, size = 0x1000, scoped, tag = 'scratch operand']
  %s0 = inlined_call_operand.hbm [shape: s32[2,1,256], index: 0, kind: input, shape index: {}]
  %s1 = inlined_call_operand.hbm [shape: f32[2,8,256], index: 1, kind: input, shape index: {}]
  %s2 = inlined_call_operand.hbm [shape: f32[2,8,16], index: 2, kind: output, shape index: {}]
  %s3 = sld [smem:[#allocation0]]
  $region61: #{tpu_custom_call.1} parent=0
    _
  %s5 = ssub.s32 1, %s3
  %s6 = scalar_select 0, %s5, %s3
  $region1: #{tpu_custom_call.1} parent=0
    #allocation3 [shape = 'u8[2048]{0}', space=vmem, size = 0x800, scoped, tag = 'input window, operand 0']
    #allocation4 [shape = 's32[2]{0}', space=sflag, size = 0x8, scoped, tag = 'scoped memory for tpu_custom_call.1']
    #allocation5 [shape = 's32[2]{0}', space=sflag, size = 0x8, scoped, tag = 'scoped memory for tpu_custom_call.1']
    #allocation6 [shape = 'u8[16384]{0}', space=vmem, size = 0x4000, scoped, tag = 'input window, operand 1']
    #allocation7 [shape = 's32[2]{0}', space=sflag, size = 0x8, scoped, tag = 'scoped memory for tpu_custom_call.1']
    #allocation8 [shape = 'u8[8192]{0}', space=vmem, size = 0x2000, scoped, tag = 'output window, operand 0']
    %7 = vsyncpa [#allocation4], 0
    %s8 = scalar_lea.sflag [#allocation4], 1
    %9 = vsyncpa %s8, 0
    %10 = vsyncpa [#allocation7], 0
    %s11 = scalar_lea.sflag [#allocation7], 1
    %12 = vsyncpa %s11, 0
    %13 = vsyncpa [#allocation5], 0
    %s14 = scalar_lea.sflag [#allocation5], 1
    %15 = vsyncpa %s14, 0
    loop: start=0, step=1, limit=4
    $region2: #{tpu_custom_call.1} parent=1 // loop_pre_header
      _
    $region3: #{tpu_custom_call.1} parent=1 // loop_header
      %s17 = sphi 0, %s21
      %p18 = scmp.ge.s32.totalorder %s17, 4
      %s24 = sphi 0, %s36
      %s25 = sphi 0, %s32
      %s26 = sphi 0, %s24
      %s27 = sphi 0, %s25
      %s28 = sphi 0, %s26
      %s29 = sphi 0, %s27
      %s41 = sphi 0, %s43
      %s44 = sphi 0, %s41
      %s45 = sphi 0, %s44
      %s61 = sphi 0, %s45
      %s69 = sphi 0, %s71
      %s72 = sphi 0, %s69
      %s73 = sphi 0, %s72
      %s89 = sphi 0, %s73
      %s95 = sphi 0, %s97
      %s98 = sphi 0, %s95
      %s99 = sphi 0, %s98
      %s115 = sphi 0, %s99
    $region4: #{tpu_custom_call.1} parent=1 // loop_header_branch
      %20 = sbr.rel (%p18) target = $region8
    $region5: #{tpu_custom_call.1} parent=1 // loop_body
      %s22 = ssub.s32 %s17, 1
      %s23 = ssub.s32 %s17, 2
      %s30 = sadd.s32 1, %s25
      %p31 = scmp.ge.s32.totalorder %s30, 1
      %s32 = scalar_select %p31, 0, %s30
      %s33 = sadd.s32 1, %s24
      %s34 = scalar_select %p31, %s33, %s24
      %p35 = scmp.ge.s32.totalorder %s34, 2
      %s36 = scalar_select %p35, 0, %s34
      %s37 = ssub.s32 %s24, %s36
      %s38 = ssub.s32 %s25, %s32
      %s39 = sor.u32 %s37, %s38
      %p40 = scmp.eq.s32.totalorder %s39, 0
      %s42 = sadd.s32 %s41, 1
      %s43 = scalar_select %p40, %s41, %s42
      %p46 = pneg %p40
      %p47 = scmp.eq.s32.totalorder %s17, 1
      %p48 = por %p46, %p47
      %p49 = scmp.ne.s32.totalorder %s41, %s44
      %p50 = scmp.eq.s32.totalorder %s17, 0
      %p51 = por %p49, %p50
      %p52 = scmp.ne.s32.totalorder %s41, %s44
      %p53 = scmp.eq.s32.totalorder %s22, 1
      %p54 = por %p52, %p53
      %p55 = scmp.ne.s32.totalorder %s44, %s45
      %p56 = scmp.eq.s32.totalorder %s22, 0
      %p57 = por %p55, %p56
      %p58 = scmp.ne.s32.totalorder %s44, %s45
      %p59 = scmp.eq.s32.totalorder %s23, 1
      %p60 = por %p58, %p59
      %p62 = scmp.ne.s32.totalorder %s45, %s61
      %p63 = scmp.eq.s32.totalorder %s23, 0
      %p64 = por %p62, %p63
      %s65 = ssub.s32 %s24, %s36
      %s66 = ssub.s32 %s25, %s32
      %s67 = sor.u32 %s65, %s66
      %p68 = scmp.eq.s32.totalorder %s67, 0
      %s70 = sadd.s32 %s69, 1
      %s71 = scalar_select %p68, %s69, %s70
      %p74 = pneg %p68
      %p75 = scmp.eq.s32.totalorder %s17, 1
      %p76 = por %p74, %p75
      %p77 = scmp.ne.s32.totalorder %s69, %s72
      %p78 = scmp.eq.s32.totalorder %s17, 0
      %p79 = por %p77, %p78
      %p80 = scmp.ne.s32.totalorder %s69, %s72
      %p81 = scmp.eq.s32.totalorder %s22, 1
      %p82 = por %p80, %p81
      %p83 = scmp.ne.s32.totalorder %s72, %s73
      %p84 = scmp.eq.s32.totalorder %s22, 0
      %p85 = por %p83, %p84
      %p86 = scmp.ne.s32.totalorder %s72, %s73
      %p87 = scmp.eq.s32.totalorder %s23, 1
      %p88 = por %p86, %p87
      %p90 = scmp.ne.s32.totalorder %s73, %s89
      %p91 = scmp.eq.s32.totalorder %s23, 0
      %p92 = por %p90, %p91
      %s93 = ssub.s32 %s24, %s36
      %p94 = scmp.eq.s32.totalorder %s93, 0
      %s96 = sadd.s32 %s95, 1
      %s97 = scalar_select %p94, %s95, %s96
      %p100 = pneg %p94
      %p101 = scmp.eq.s32.totalorder %s17, 1
      %p102 = por %p100, %p101
      %p103 = scmp.ne.s32.totalorder %s95, %s98
      %p104 = scmp.eq.s32.totalorder %s17, 0
      %p105 = por %p103, %p104
      %p106 = scmp.ne.s32.totalorder %s95, %s98
      %p107 = scmp.eq.s32.totalorder %s22, 1
      %p108 = por %p106, %p107
      %p109 = scmp.ne.s32.totalorder %s98, %s99
      %p110 = scmp.eq.s32.totalorder %s22, 0
      %p111 = por %p109, %p110
      %p112 = scmp.ne.s32.totalorder %s98, %s99
      %p113 = scmp.eq.s32.totalorder %s23, 1
      %p114 = por %p112, %p113
      %p116 = scmp.ne.s32.totalorder %s99, %s115
      %p117 = scmp.eq.s32.totalorder %s23, 0
      %p118 = por %p116, %p117
      %p119 = scmp.le.s32.totalorder 1, %s17
      %p120 = scmp.lt.s32.totalorder %s17, 3
      %p121 = pnand %p119, %p120
      %p122 = pneg %p121
      // Predicated region
      $region9: #{tpu_custom_call.1} parent=5 // pred_check
        _
      $region10: #{tpu_custom_call.1} parent=5 // pred_check_branch
        %124 = sbr.rel (%p121) target = $region12
      $region11: #{tpu_custom_call.1} parent=5 // pred_region
        %s125 = ssub.s32 %s17, 1
      $region12: #{tpu_custom_call.1} parent=5 // pred_fallthru
        _
      %p126 = scmp.lt.s32.totalorder %s17, 2
      // Predicated region
      $region13: #{tpu_custom_call.1} parent=5 // pred_check
        %p127 = pneg %p126
      $region14: #{tpu_custom_call.1} parent=5 // pred_check_branch
        %129 = sbr.rel (%p127) target = $region16
      $region15: #{tpu_custom_call.1} parent=5 // pred_region
        // Predicated region
        $region17: #{tpu_custom_call.1} parent=15 // pred_check
          %p130 = pneg %p51
        $region18: #{tpu_custom_call.1} parent=15 // pred_check_branch
          %132 = sbr.rel (%p130) target = $region20
        $region19: #{tpu_custom_call.1} parent=15 // pred_region
          %s133 = sand.u32 %s41, 1
          %s134 = scalar_lea.sflag [#allocation4], %s133
          %s135 = sand.u32 %s41, 1
          %s136 = smul.addr %s135, 2
          %s137 = scalar_lea.vmem [#allocation3], %s136
          %s138 = smul.u32 2, %s25
          %s140 = ssub.s32 32, 32
          %141 = vsyncadd %s134, %s140
          %s142 = smul.addr %s24, 2
          %s143 = sadd.s32 %s138, %s142
          %s144 = smul.addr %s143, 16
          %s145 = scalar_lea.hbm %s0, %s144
          %s147 = sshll.u32 %s137, 4
          %s148 = int_to_ptr.vmem [resolvable:$true] %s147
          %150 = dma.hbm_to_vmem [thread:$0]  %s145, 32, %s148, %s134
        $region20: #{tpu_custom_call.1} parent=15 // pred_fallthru
          _
        // Predicated region
        $region21: #{tpu_custom_call.1} parent=15 // pred_check
          %p151 = pneg %p79
        $region22: #{tpu_custom_call.1} parent=15 // pred_check_branch
          %153 = sbr.rel (%p151) target = $region24
        $region23: #{tpu_custom_call.1} parent=15 // pred_region
          %s154 = sand.u32 %s69, 1
          %s155 = scalar_lea.sflag [#allocation7], %s154
          %s156 = sand.u32 %s69, 1
          %s157 = smul.addr %s156, 16
          %s158 = scalar_lea.vmem [#allocation6], %s157
          %s159 = smul.u32 2, %s25
          %s161 = ssub.s32 256, 256
          %162 = vsyncadd %s155, %s161
          %s163 = smul.addr %s24, 2
          %s164 = sadd.s32 %s159, %s163
          %s165 = smul.addr %s164, 128
          %s166 = scalar_lea.hbm %s1, %s165
          %s168 = sshll.u32 %s158, 4
          %s169 = int_to_ptr.vmem [resolvable:$true] %s168
          %171 = dma.hbm_to_vmem [thread:$0]  %s166, 256, %s169, %s155
        $region24: #{tpu_custom_call.1} parent=15 // pred_fallthru
          _
      $region16: #{tpu_custom_call.1} parent=5 // pred_fallthru
        _
      %p172 = scmp.le.s32.totalorder 1, %s17
      %p173 = scmp.lt.s32.totalorder %s17, 3
      %p174 = pnand %p172, %p173
      %p175 = pneg %p174
      // Predicated region
      $region25: #{tpu_custom_call.1} parent=5 // pred_check
        _
      $region26: #{tpu_custom_call.1} parent=5 // pred_check_branch
        %177 = sbr.rel (%p174) target = $region28
      $region27: #{tpu_custom_call.1} parent=5 // pred_region
        %s178 = ssub.s32 %s17, 1
        %s179 = sand.u32 %s44, 1
        %s180 = scalar_lea.sflag [#allocation4], %s179
        %s181 = sand.u32 %s44, 1
        %s182 = smul.addr %s181, 2
        %s183 = scalar_lea.vmem [#allocation3], %s182
        // Predicated region
        $region29: #{tpu_custom_call.1} parent=27 // pred_check
          %p184 = pneg %p57
        $region30: #{tpu_custom_call.1} parent=27 // pred_check_branch
          %186 = sbr.rel (%p184) target = $region32
        $region31: #{tpu_custom_call.1} parent=27 // pred_region
          %187 = dma.done %s180, 32
        $region32: #{tpu_custom_call.1} parent=27 // pred_fallthru
          _
        %s188 = sand.u32 %s72, 1
        %s189 = scalar_lea.sflag [#allocation7], %s188
        %s190 = sand.u32 %s72, 1
        %s191 = smul.addr %s190, 16
        %s192 = scalar_lea.vmem [#allocation6], %s191
        // Predicated region
        $region33: #{tpu_custom_call.1} parent=27 // pred_check
          %p193 = pneg %p85
        $region34: #{tpu_custom_call.1} parent=27 // pred_check_branch
          %195 = sbr.rel (%p193) target = $region36
        $region35: #{tpu_custom_call.1} parent=27 // pred_region
          %196 = dma.done %s189, 256
        $region36: #{tpu_custom_call.1} parent=27 // pred_fallthru
          _
        %s197 = sand.u32 %s44, 1
        %s198 = scalar_lea.sflag [#allocation4], %s197
        %s199 = sand.u32 %s44, 1
        %s200 = smul.addr %s199, 2
        %s201 = scalar_lea.vmem [#allocation3], %s200
        %p202 = pneg %p57
        %p203 = pneg %p54
        %s204 = sand.u32 %s72, 1
        %s205 = scalar_lea.sflag [#allocation7], %s204
        %s206 = sand.u32 %s72, 1
        %s207 = smul.addr %s206, 16
        %s208 = scalar_lea.vmem [#allocation6], %s207
        %p209 = pneg %p85
        %p210 = pneg %p82
        %p211 = pneg %p111
        %p212 = pneg %p108
        %s213 = sand.u32 %s98, 1
        %s214 = scalar_lea.sflag [#allocation5], %s213
        %s215 = sand.u32 %s98, 1
        %s216 = smul.addr %s215, 8
        %s217 = scalar_lea.vmem [#allocation8], %s216
        %s218 = smul.u32 2, %s27
        %s219 = smul.u32 2, %s27
        %v220 = vld [vmem:[%s183] sm:$0x3]
        %v221 = vld [vmem:[%s192] sm:$0xff]
        %v222 = vld [vmem:[%s192 + $0x8] sm:$0xff]
        %v223 = vlaneseq
        %v224 = vshrl.u32 %v223, 7
        %v225 = vadd.s32 %v224, 8
        %v226 = vlaneseq
        %v227 = vshrl.u32 %v226, 7
        %v228 = vsub.s32 0, %v227
        %v229 = vrot.slane %v220, %v228
        %v230 = vlaneseq
        %v231 = vshrl.u32 %v230, 7
        %v232 = vsub.s32 1, %v231
        %v233 = vrot.slane %v220, %v232
        %vm234 = vcmp.eq.s32.totalorder %v229, %v224
        %vm235 = vcmp.eq.s32.totalorder %v233, %v224
        %vm236 = vcmp.eq.s32.totalorder %v229, %v225
        %vm237 = vcmp.eq.s32.totalorder %v233, %v225
        %v238 = vsel %vm234, 1, 0
        %v239 = vsel %vm235, 1, 0
        %v240 = vsel %vm236, 1, 0
        %v241 = vsel %vm237, 1, 0
        %v242 = vcvt.s32.f32 %v238
        %v243 = vcvt.s32.f32 %v239
        %v244 = vcvt.s32.f32 %v240
        %v245 = vcvt.s32.f32 %v241
        %246 = vmatprep.subr.mxu0 0.0
        %247 = vmatpush1.xpose.msra.mxu0 0.0
        %248 = vmatprep.subr.mxu0 0.0
        %249 = vmatpush1.xpose.msra.mxu0 0.0
        %250 = vmatprep.subr.mxu0 0.0
        %251 = vmatpush1.xpose.msra.mxu0 0.0
        %252 = vmatprep.subr.mxu0 0.0
        %253 = vmatpush1.xpose.msra.mxu0 0.0
        %254 = vmatprep.subr.mxu0 0.0
        %255 = vmatpush1.xpose.msra.mxu0 0.0
        %256 = vmatprep.subr.mxu0 0.0
        %257 = vmatpush1.xpose.msra.mxu0 0.0
        %258 = vmatprep.subr.mxu0 0.0
        %259 = vmatpush1.xpose.msra.mxu0 0.0
        %260 = vmatprep.subr.mxu0 0.0
        %261 = vmatpush1.xpose.msra.mxu0 0.0
        %262 = vmatprep.subr.mxu0 0.0
        %263 = vmatpush1.xpose.msra.mxu0 0.0
        %264 = vmatprep.subr.mxu0 0.0
        %265 = vmatpush1.xpose.msra.mxu0 0.0
        %266 = vmatprep.subr.mxu0 0.0
        %267 = vmatpush1.xpose.msra.mxu0 0.0
        %268 = vmatprep.subr.mxu0 0.0
        %269 = vmatpush1.xpose.msra.mxu0 0.0
        %270 = vmatprep.subr.mxu0 0.0
        %271 = vmatpush1.xpose.msra.mxu0 0.0
        %272 = vmatprep.subr.mxu0 0.0
        %273 = vmatpush1.xpose.msra.mxu0 0.0
        %274 = vmatprep.subr.mxu0 %v245
        %275 = vmatpush1.xpose.msra.mxu0 %v244
        %276 = vmatprep.subr.mxu0 %v243
        %277 = vmatpush1.xpose.msra.mxu0 %v242
        %278 = vmatprep.subr.mxu0 0.0
        %279 = vmatpush2.xpose.msra.mxu0 0.0
        %280 = vmatprep.subr.mxu0 0.0
        %281 = vmatpush2.xpose.msra.mxu0 0.0
        %282 = vmatprep.subr.mxu0 0.0
        %283 = vmatpush2.xpose.msra.mxu0 0.0
        %284 = vmatprep.subr.mxu0 0.0
        %285 = vmatpush2.xpose.msra.mxu0 0.0
        %286 = vmatprep.subr.mxu0 0.0
        %287 = vmatpush2.xpose.msra.mxu0 0.0
        %288 = vmatprep.subr.mxu0 0.0
        %289 = vmatpush2.xpose.msra.mxu0 0.0
        %290 = vmatprep.subr.mxu0 0.0
        %291 = vmatpush2.xpose.msra.mxu0 0.0
        %292 = vmatprep.subr.mxu0 0.0
        %293 = vmatpush2.xpose.msra.mxu0 0.0
        %294 = vmatprep.subr.mxu0 0.0
        %295 = vmatpush2.xpose.msra.mxu0 0.0
        %296 = vmatprep.subr.mxu0 0.0
        %297 = vmatpush2.xpose.msra.mxu0 0.0
        %298 = vmatprep.subr.mxu0 0.0
        %299 = vmatpush2.xpose.msra.mxu0 0.0
        %300 = vmatprep.subr.mxu0 0.0
        %301 = vmatpush2.xpose.msra.mxu0 0.0
        %302 = vmatprep.subr.mxu0 0.0
        %303 = vmatpush2.xpose.msra.mxu0 0.0
        %304 = vmatprep.subr.mxu0 0.0
        %305 = vmatpush2.xpose.msra.mxu0 0.0
        %306 = vmatprep.subr.mxu0 0.0
        %307 = vmatpush2.xpose.msra.mxu0 0.0
        %308 = vmatprep.subr.mxu0 0.0
        %309 = vmatpush2.xpose.msra.mxu0 0.0
        %310 = vmatprep.mubr.f32.mxu0 %v222
        %311 = vmatmul.mubr.f32.gmra.mxu0 %v221
        %v312 = vpop.f32.mrf.mxu0
        %v313 = vadd.f32 0.0, %v312
        %v314 = vpop.f32.mrf.mxu0
        %315 = vdwg.mxu0
        %p316 = scmp.eq.s32.totalorder %s27, 0
        // Predicated region
        $region37: #{tpu_custom_call.1} parent=27 // pred_check
          %p317 = pneg %p316
        $region38: #{tpu_custom_call.1} parent=27 // pred_check_branch
          %319 = sbr.rel (%p317) target = $region40
        $region39: #{tpu_custom_call.1} parent=27 // pred_region
          %vm320 = vcmask 130048
          %321 = vst.msk [vmem:[#allocation2] sm:$0xff] %vm320, %v313
        $region40: #{tpu_custom_call.1} parent=27 // pred_fallthru
          _
        %p322 = scmp.gt.s32.totalorder %s27, 0
        // Predicated region
        $region41: #{tpu_custom_call.1} parent=27 // pred_check
          %p323 = pneg %p322
        $region42: #{tpu_custom_call.1} parent=27 // pred_check_branch
          %325 = sbr.rel (%p323) target = $region44
        $region43: #{tpu_custom_call.1} parent=27 // pred_region
          %v326 = vld [vmem:[#allocation2] sm:$0xff]
          %v327 = vadd.f32 %v326, %v313
          %vm328 = vcmask 130048
          %329 = vst.msk [vmem:[#allocation2] sm:$0xff] %vm328, %v327
        $region44: #{tpu_custom_call.1} parent=27 // pred_fallthru
          _
        // Predicated region
        $region45: #{tpu_custom_call.1} parent=27 // pred_check
          %p330 = pneg %p316
        $region46: #{tpu_custom_call.1} parent=27 // pred_check_branch
          %332 = sbr.rel (%p330) target = $region48
        $region47: #{tpu_custom_call.1} parent=27 // pred_region
          %v333 = vld [vmem:[#allocation2] sm:$0xff]
          %vm334 = vcmask 130048
          %335 = vst.msk [vmem:[%s217] sm:$0xff] %vm334, %v333
        $region48: #{tpu_custom_call.1} parent=27 // pred_fallthru
          _
        %s336 = sand.u32 %s98, 1
        %s337 = scalar_lea.sflag [#allocation5], %s336
        %s338 = sand.u32 %s98, 1
        %s339 = smul.addr %s338, 8
        %s340 = scalar_lea.vmem [#allocation8], %s339
        // Predicated region
        $region49: #{tpu_custom_call.1} parent=27 // pred_check
          %p341 = pneg %p108
        $region50: #{tpu_custom_call.1} parent=27 // pred_check_branch
          %343 = sbr.rel (%p341) target = $region52
        $region51: #{tpu_custom_call.1} parent=27 // pred_region
          %s345 = ssub.s32 128, 128
          %346 = vsyncadd %s337, %s345
          %s347 = smul.addr %s26, 128
          %s348 = scalar_lea.hbm %s2, %s347
          %s350 = sshll.u32 %s340, 4
          %s351 = int_to_ptr.vmem [resolvable:$true] %s350
          %353 = dma.vmem_to_hbm [thread:$0]  %s351, 128, %s348, %s337
        $region52: #{tpu_custom_call.1} parent=27 // pred_fallthru
          _
      $region28: #{tpu_custom_call.1} parent=5 // pred_fallthru
        _
      %p354 = scmp.le.s32.totalorder 2, %s17
      // Predicated region
      $region53: #{tpu_custom_call.1} parent=5 // pred_check
        %p355 = pneg %p354
      $region54: #{tpu_custom_call.1} parent=5 // pred_check_branch
        %357 = sbr.rel (%p355) target = $region56
      $region55: #{tpu_custom_call.1} parent=5 // pred_region
        %s358 = ssub.s32 %s17, 2
        // Predicated region
        $region57: #{tpu_custom_call.1} parent=55 // pred_check
          %p359 = pneg %p114
        $region58: #{tpu_custom_call.1} parent=55 // pred_check_branch
          %361 = sbr.rel (%p359) target = $region60
        $region59: #{tpu_custom_call.1} parent=55 // pred_region
          %s362 = sand.u32 %s99, 1
          %s363 = scalar_lea.sflag [#allocation5], %s362
          %s364 = sand.u32 %s99, 1
          %s365 = smul.addr %s364, 8
          %s366 = scalar_lea.vmem [#allocation8], %s365
          %367 = dma.done %s363, 128
        $region60: #{tpu_custom_call.1} parent=55 // pred_fallthru
          _
      $region56: #{tpu_custom_call.1} parent=5 // pred_fallthru
        _
    $region6: #{tpu_custom_call.1} parent=1 // loop_footer
      %s21 = sadd.s32 1, %s17
    $region7: #{tpu_custom_call.1} parent=1 // loop_footer_branch
      %16 = sbr.rel target = $region3
    $region8: #{tpu_custom_call.1} parent=1 // loop_exit
      _
    %368 = vsyncpa [#allocation4], 1
    %s369 = scalar_lea.sflag [#allocation4], 1
    %370 = vsyncpa %s369, 1
    %371 = vsyncpa [#allocation7], 1
    %s372 = scalar_lea.sflag [#allocation7], 1
    %373 = vsyncpa %s372, 1
    %374 = vsyncpa [#allocation5], 1
    %s375 = scalar_lea.sflag [#allocation5], 1
    %376 = vsyncpa %s375, 1

</llo_original>
